<compile_context>
chip_gen: v7x
topology: tpu7x:2x2x1
jax: 0.10.0
libtpu: 0.0.40
codegen_flags: <defaults>
</compile_context>

<pallas_src>
import functools

import jax
import jax.numpy as jnp
from jax.experimental import pallas as pl
from jax.experimental.pallas import tpu as pltpu

# ----------------------------- configuration -------------------------------
PAD_ID = 0
EOS_ID = 2
VOCAB = 64
B = 2            # batch
L = 8            # max_source_length
H = 32           # config.hidden_size
NUM_CLASSES = 2
LANES = 128      # vreg lane width -> lane-dense output slab


# ------------------------------ Pallas kernel ------------------------------
def _defect_head_kernel(bsz, idx_ref, hid_hbm, w_ref, b_ref, prob_ref,
                        vec_vmem, dma_sems):
    """EOS-row gather (manual DMA) + Linear(H, 2) + 2-class softmax."""
    # 1) Data-dependent gather: DMA exactly one (1, H) hidden row per example
    #    straight from HBM (L x less traffic than shipping the whole (B,L,H)).
    copies = []
    for bb in range(bsz):
        cp = pltpu.make_async_copy(
            hid_hbm.at[pl.ds(idx_ref[bb], 1), :],   # flat row index from SMEM
            vec_vmem.at[pl.ds(bb, 1), :],
            dma_sems.at[bb],
        )
        cp.start()
        copies.append(cp)
    for cp in copies:                                 # all DMAs issued, then waited
        cp.wait()

    vec = vec_vmem[...]                               # (B, H) f32

    # 2) Classifier on the VPU/XLU: K=32, N=2 is a pathological MXU shape, so
    #    compute the two logits as multiply + lane reduction instead of a dot.
    w = w_ref[...]                                    # (2, H), torch layout
    l0 = jnp.sum(vec * w[0:1, :], axis=-1, keepdims=True) + b_ref[0]   # (B, 1)
    l1 = jnp.sum(vec * w[1:2, :], axis=-1, keepdims=True) + b_ref[1]   # (B, 1)

    # 3) softmax over 2 classes == sigmoid of the logit difference
    #    (single exp, no max/sum reductions; mathematically identical).
    p1 = 1.0 / (1.0 + jnp.exp(l0 - l1))               # (B, 1)
    p0 = 1.0 - p1

    # 4) Lane-dense store: full (B, 128) slab with probs in lanes 0/1 and zeros
    #    elsewhere; the wrapper slices off the first NUM_CLASSES lanes.
    lane = jax.lax.broadcasted_iota(jnp.int32, prob_ref.shape, 1)
    prob_ref[...] = jnp.where(lane == 0, p0, jnp.where(lane == 1, p1, 0.0))


def defect_head(flat_idx, hidden_flat, w, b):
    """Single grid-less pallas_call; only the EOS rows of hidden ever leave HBM."""
    bsz = flat_idx.shape[0]
    h = hidden_flat.shape[-1]
    return pl.pallas_call(
        functools.partial(_defect_head_kernel, bsz),
        out_shape=jax.ShapeDtypeStruct((bsz, LANES), jnp.float32),
        in_specs=[
            pl.BlockSpec(memory_space=pltpu.MemorySpace.SMEM),  # flat EOS row idx
            pl.BlockSpec(memory_space=pl.ANY),                  # hidden stays in HBM
            pl.BlockSpec(w.shape, lambda: (0, 0)),              # (2, H) classifier W
            pl.BlockSpec(memory_space=pltpu.MemorySpace.SMEM),  # (2,) classifier bias
        ],
        out_specs=pl.BlockSpec((bsz, LANES), lambda: (0, 0)),
        scratch_shapes=[
            pltpu.VMEM((bsz, h), jnp.float32),                  # gathered EOS vectors
            pltpu.SemaphoreType.DMA((bsz,)),
        ],
        # TODO(synk): at real T5 dims (H~768, L~512, large B) add grid=(B_tiles,)
        # with dimension_semantics=("parallel",) and a vmem_limit with headroom
        # so v7x's 64 MiB VMEM is respected; at (2,8,32) one fat invocation
        # amortizes the ~0.35us per-step overhead best.
    )(flat_idx, hidden_flat, w, b)


# --------------------------- plain-JAX glue / model -------------------------
def forward(params, input_ids, *, debug_check_eos=False):
    """Mirrors DefectDetectionModel.forward: prob = softmax(classifier(eos_vec))."""
    # input_ids = input_ids.view(-1, max_source_length)
    input_ids = input_ids.reshape(-1, L)
    bsz = input_ids.shape[0]

    # torch raises if <eos> counts differ across examples.  That check needs a
    # device->host sync, so it is gated behind an eager-only debug flag.
    if debug_check_eos:
        counts = jnp.sum(input_ids == EOS_ID, axis=1)
        if bool(jnp.any(counts != counts[0])):
            raise ValueError("All examples must have the same number of <eos> tokens.")

    # TODO(synk): the real T5 encoder/decoder is external to this module; a
    # deterministic embedding lookup stands in for the last decoder hidden states.
    hidden_states = params["embedding"][input_ids]              # (B, L, H)
    h = hidden_states.shape[-1]

    # Last <eos> position per example (cheap int32 math, no host sync).
    pos = jnp.arange(L, dtype=jnp.int32)[None, :]
    last_idx = jnp.max(jnp.where(input_ids == EOS_ID, pos, -1), axis=1)
    # Rows without any <eos> fall back to position 0 (torch would error here).
    last_idx = jnp.maximum(last_idx, 0)
    flat_idx = (jnp.arange(bsz, dtype=jnp.int32) * L + last_idx).astype(jnp.int32)

    prob_padded = defect_head(flat_idx,
                              hidden_states.reshape(bsz * L, h),
                              params["cls_w"], params["cls_b"])
    return prob_padded[:, :NUM_CLASSES]


def init_params(key):
    k0, k1, k2 = jax.random.split(key, 3)
    return {
        "embedding": jax.random.normal(k0, (VOCAB, H), jnp.float32) * 0.1,
        # torch nn.Linear(H, 2): weight (2, H), bias (2,) — kept in torch layout.
        "cls_w": jax.random.normal(k1, (NUM_CLASSES, H), jnp.float32) * 0.1,
        "cls_b": jax.random.normal(k2, (NUM_CLASSES,), jnp.float32) * 0.1,
    }


# ---------------------------------- main ------------------------------------
if __name__ == "__main__":
    key = jax.random.PRNGKey(0)
    params = init_params(key)

    # deterministic token ids in [3, VOCAB), last token forced to </s> (EOS_ID)
    ids = jax.random.randint(jax.random.PRNGKey(1), (B, L), 3, VOCAB,
                             dtype=jnp.int32)
    ids = ids.at[:, -1].set(EOS_ID)

    fwd = jax.jit(lambda p, x: forward(p, x))
    prob = jax.block_until_ready(fwd(params, ids))

    # sanity: shape and probabilities sum to 1
    assert prob.shape == (B, NUM_CLASSES)
    assert bool(jnp.all(jnp.abs(jnp.sum(prob, axis=-1) - 1.0) < 1e-5))

    # reference check in plain JAX
    hs = params["embedding"][ids]
    pos = jnp.arange(L)[None, :]
    last_idx = jnp.max(jnp.where(ids == EOS_ID, pos, -1), axis=1)
    vec = hs[jnp.arange(B), last_idx]
    logits_ref = vec @ params["cls_w"].T + params["cls_b"]
    prob_ref = jax.nn.softmax(logits_ref, axis=-1)
    assert bool(jnp.all(jnp.abs(prob - prob_ref) < 1e-4))

    print("KERNEL_OK")
</pallas_src>

<mosaic_0001>
module attributes {stable_mosaic.version = 11 : i64} {
  func.func @_defect_head_kernel(%arg0: memref<2xi32, #tpu.memory_space<smem>>, %arg1: memref<16x32xf32, #tpu.memory_space<any>>, %arg2: memref<2x32xf32, #tpu.memory_space<vmem>>, %arg3: memref<2xf32, #tpu.memory_space<smem>>, %arg4: memref<2x128xf32, #tpu.memory_space<vmem>>, %arg5: memref<2x32xf32, #tpu.memory_space<vmem>>, %arg6: memref<2x!tpu.dma_semaphore, #tpu.memory_space<semaphore_mem>>) attributes {dimension_semantics = [], scalar_prefetch = 0 : i64, scratch_operands = 2 : i64, tpu.core_type = #tpu.core_type<tc>} {
    %c0 = arith.constant 0 : index
    %0 = memref.load %arg0[%c0] : memref<2xi32, #tpu.memory_space<smem>>
    %c0_i32 = arith.constant 0 : i32
    %c0_i32_0 = arith.constant 0 : i32
    %1 = tpu.memref_slice %arg1[%0, %c0_i32_0] : memref<16x32xf32, #tpu.memory_space<any>> -> memref<1x32xf32, #tpu.memory_space<any>>
    %c0_i32_1 = arith.constant 0 : i32
    %c0_i32_2 = arith.constant 0 : i32
    %2 = tpu.memref_slice %arg5[%c0_i32_1, %c0_i32_2] : memref<2x32xf32, #tpu.memory_space<vmem>> -> memref<1x32xf32, #tpu.memory_space<vmem>>
    %3 = tpu.memref_slice %arg6[%c0_i32] : memref<2x!tpu.dma_semaphore, #tpu.memory_space<semaphore_mem>> -> memref<1x!tpu.dma_semaphore, #tpu.memory_space<semaphore_mem>>
    %4 = tpu.memref_squeeze %3 : memref<1x!tpu.dma_semaphore, #tpu.memory_space<semaphore_mem>> -> memref<!tpu.dma_semaphore, #tpu.memory_space<semaphore_mem>>
    tpu.enqueue_dma source(%1 : memref<1x32xf32, #tpu.memory_space<any>>) target(%2 : memref<1x32xf32, #tpu.memory_space<vmem>>) target_semaphore(%4 : memref<!tpu.dma_semaphore, #tpu.memory_space<semaphore_mem>>)
    %c1 = arith.constant 1 : index
    %5 = memref.load %arg0[%c1] : memref<2xi32, #tpu.memory_space<smem>>
    %c1_i32 = arith.constant 1 : i32
    %c0_i32_3 = arith.constant 0 : i32
    %6 = tpu.memref_slice %arg1[%5, %c0_i32_3] : memref<16x32xf32, #tpu.memory_space<any>> -> memref<1x32xf32, #tpu.memory_space<any>>
    %c1_i32_4 = arith.constant 1 : i32
    %c0_i32_5 = arith.constant 0 : i32
    %7 = tpu.memref_slice %arg5[%c1_i32_4, %c0_i32_5] : memref<2x32xf32, #tpu.memory_space<vmem>> -> memref<1x32xf32, #tpu.memory_space<vmem>>
    %8 = tpu.memref_slice %arg6[%c1_i32] : memref<2x!tpu.dma_semaphore, #tpu.memory_space<semaphore_mem>> -> memref<1x!tpu.dma_semaphore, #tpu.memory_space<semaphore_mem>>
    %9 = tpu.memref_squeeze %8 : memref<1x!tpu.dma_semaphore, #tpu.memory_space<semaphore_mem>> -> memref<!tpu.dma_semaphore, #tpu.memory_space<semaphore_mem>>
    tpu.enqueue_dma source(%6 : memref<1x32xf32, #tpu.memory_space<any>>) target(%7 : memref<1x32xf32, #tpu.memory_space<vmem>>) target_semaphore(%9 : memref<!tpu.dma_semaphore, #tpu.memory_space<semaphore_mem>>)
    %c0_i32_6 = arith.constant 0 : i32
    %c0_i32_7 = arith.constant 0 : i32
    %10 = tpu.memref_slice %arg1[%0, %c0_i32_7] : memref<16x32xf32, #tpu.memory_space<any>> -> memref<1x32xf32, #tpu.memory_space<any>>
    %c0_i32_8 = arith.constant 0 : i32
    %c0_i32_9 = arith.constant 0 : i32
    %11 = tpu.memref_slice %arg5[%c0_i32_8, %c0_i32_9] : memref<2x32xf32, #tpu.memory_space<vmem>> -> memref<1x32xf32, #tpu.memory_space<vmem>>
    %12 = tpu.memref_slice %arg6[%c0_i32_6] : memref<2x!tpu.dma_semaphore, #tpu.memory_space<semaphore_mem>> -> memref<1x!tpu.dma_semaphore, #tpu.memory_space<semaphore_mem>>
    %13 = tpu.memref_squeeze %12 : memref<1x!tpu.dma_semaphore, #tpu.memory_space<semaphore_mem>> -> memref<!tpu.dma_semaphore, #tpu.memory_space<semaphore_mem>>
    tpu.wait_dma2 semaphore(%13 : memref<!tpu.dma_semaphore, #tpu.memory_space<semaphore_mem>>) src(%10 : memref<1x32xf32, #tpu.memory_space<any>>) dst(%11 : memref<1x32xf32, #tpu.memory_space<vmem>>)
    %c1_i32_10 = arith.constant 1 : i32
    %c0_i32_11 = arith.constant 0 : i32
    %14 = tpu.memref_slice %arg1[%5, %c0_i32_11] : memref<16x32xf32, #tpu.memory_space<any>> -> memref<1x32xf32, #tpu.memory_space<any>>
    %c1_i32_12 = arith.constant 1 : i32
    %c0_i32_13 = arith.constant 0 : i32
    %15 = tpu.memref_slice %arg5[%c1_i32_12, %c0_i32_13] : memref<2x32xf32, #tpu.memory_space<vmem>> -> memref<1x32xf32, #tpu.memory_space<vmem>>
    %16 = tpu.memref_slice %arg6[%c1_i32_10] : memref<2x!tpu.dma_semaphore, #tpu.memory_space<semaphore_mem>> -> memref<1x!tpu.dma_semaphore, #tpu.memory_space<semaphore_mem>>
    %17 = tpu.memref_squeeze %16 : memref<1x!tpu.dma_semaphore, #tpu.memory_space<semaphore_mem>> -> memref<!tpu.dma_semaphore, #tpu.memory_space<semaphore_mem>>
    tpu.wait_dma2 semaphore(%17 : memref<!tpu.dma_semaphore, #tpu.memory_space<semaphore_mem>>) src(%14 : memref<1x32xf32, #tpu.memory_space<any>>) dst(%15 : memref<1x32xf32, #tpu.memory_space<vmem>>)
    %c0_14 = arith.constant 0 : index
    %c0_15 = arith.constant 0 : index
    %18 = vector.load %arg5[%c0_14, %c0_15] : memref<2x32xf32, #tpu.memory_space<vmem>>, vector<2x32xf32>
    %c0_16 = arith.constant 0 : index
    %c0_17 = arith.constant 0 : index
    %19 = vector.load %arg2[%c0_16, %c0_17] : memref<2x32xf32, #tpu.memory_space<vmem>>, vector<2x32xf32>
    %20 = vector.extract_strided_slice %19 {offsets = [0, 0], sizes = [1, 32], strides = [1, 1]} : vector<2x32xf32> to vector<1x32xf32>
    %21 = vector.broadcast %20 : vector<1x32xf32> to vector<2x32xf32>
    %22 = arith.mulf %18, %21 : vector<2x32xf32>
    %cst = arith.constant dense<0.000000e+00> : vector<2xf32>
    %23 = vector.multi_reduction <add>, %22, %cst [1] : vector<2x32xf32> to vector<2xf32>
    %24 = vector.shape_cast %23 : vector<2xf32> to vector<2x1xf32>
    %c0_18 = arith.constant 0 : index
    %25 = memref.load %arg3[%c0_18] : memref<2xf32, #tpu.memory_space<smem>>
    %26 = vector.broadcast %25 : f32 to vector<2x1xf32>
    %27 = arith.addf %24, %26 : vector<2x1xf32>
    %28 = vector.extract_strided_slice %19 {offsets = [1, 0], sizes = [1, 32], strides = [1, 1]} : vector<2x32xf32> to vector<1x32xf32>
    %29 = vector.broadcast %28 : vector<1x32xf32> to vector<2x32xf32>
    %30 = arith.mulf %18, %29 : vector<2x32xf32>
    %cst_19 = arith.constant dense<0.000000e+00> : vector<2xf32>
    %31 = vector.multi_reduction <add>, %30, %cst_19 [1] : vector<2x32xf32> to vector<2xf32>
    %32 = vector.shape_cast %31 : vector<2xf32> to vector<2x1xf32>
    %c1_20 = arith.constant 1 : index
    %33 = memref.load %arg3[%c1_20] : memref<2xf32, #tpu.memory_space<smem>>
    %34 = vector.broadcast %33 : f32 to vector<2x1xf32>
    %35 = arith.addf %32, %34 : vector<2x1xf32>
    %36 = arith.subf %27, %35 : vector<2x1xf32>
    %37 = math.exp %36 : vector<2x1xf32>
    %cst_21 = arith.constant 1.000000e+00 : f32
    %38 = vector.broadcast %cst_21 : f32 to vector<2x1xf32>
    %39 = arith.addf %38, %37 : vector<2x1xf32>
    %cst_22 = arith.constant 1.000000e+00 : f32
    %40 = vector.broadcast %cst_22 : f32 to vector<2x1xf32>
    %41 = arith.divf %40, %39 : vector<2x1xf32>
    %cst_23 = arith.constant 1.000000e+00 : f32
    %42 = vector.broadcast %cst_23 : f32 to vector<2x1xf32>
    %43 = arith.subf %42, %41 : vector<2x1xf32>
    %44 = tpu.iota {dimensions = array<i32: 1>} : vector<2x128xi32>
    %c0_i32_24 = arith.constant 0 : i32
    %45 = vector.broadcast %c0_i32_24 : i32 to vector<2x128xi32>
    %46 = arith.cmpi eq, %44, %45 : vector<2x128xi32>
    %c1_i32_25 = arith.constant 1 : i32
    %47 = vector.broadcast %c1_i32_25 : i32 to vector<2x128xi32>
    %48 = arith.cmpi eq, %44, %47 : vector<2x128xi32>
    %cst_26 = arith.constant 0.000000e+00 : f32
    %49 = vector.shape_cast %41 : vector<2x1xf32> to vector<2x1xf32>
    %50 = vector.broadcast %49 : vector<2x1xf32> to vector<2x128xf32>
    %51 = vector.broadcast %cst_26 : f32 to vector<2x128xf32>
    %52 = arith.select %48, %50, %51 : vector<2x128xi1>, vector<2x128xf32>
    %53 = vector.shape_cast %43 : vector<2x1xf32> to vector<2x1xf32>
    %54 = vector.broadcast %53 : vector<2x1xf32> to vector<2x128xf32>
    %55 = arith.select %46, %54, %52 : vector<2x128xi1>, vector<2x128xf32>
    %c0_27 = arith.constant 0 : index
    %c0_28 = arith.constant 0 : index
    %56 = vector.load %arg4[%c0_27, %c0_28] : memref<2x128xf32, #tpu.memory_space<vmem>>, vector<2x128xf32>
    tpu.vector_store %arg4[%c0_27, %c0_28], %55 {strides = array<i32>} : memref<2x128xf32, #tpu.memory_space<vmem>>, vector<2x128xf32>,
    return
  }
}

</mosaic_0001>

<llo_original>
// kernel: _lambda_.1
$region0: #{_lambda_.1}
  #allocation0 [shape = 'u32[]', space=smem, size = 0x4, offset = 0x4, fixed_abs, tag = 'smem constant byte address 0x4 - core index']
  #allocation1 [shape = 'u32[144,128]{1,0:T(1,128)}', space=vmem, size = 0x12000, scoped, tag = 'internal scratch']
  #allocation2 [shape = 'f32[2,32]{1,0:T(2,128)}', space=vmem, size = 0x400, scoped, tag = 'scratch operand']
  #allocation3 [shape = 's32[2]{0}', space=sflag, size = 0x8, scoped, tag = 'scratch operand']
  #allocation10 [shape = 's32[]', space=sflag, size = 0x4, offset = 0, fixed_abs, tag = 'sflag constant byte address 0x0 - dummy sync flag']
  #allocation11 [shape = 's32[]', space=sflag, size = 0x4, offset = 0, fixed_abs, tag = 'sflag constant byte address 0x0 - dummy sync flag']
  %s0 = inlined_call_operand.vmem [shape: s32[2], index: 0, kind: input, shape index: {}]
  %s1 = inlined_call_operand.vmem [shape: f32[16,32], index: 1, kind: input, shape index: {}]
  %s2 = inlined_call_operand.vmem [shape: f32[2,32], index: 2, kind: input, shape index: {}]
  %s3 = inlined_call_operand.vmem [shape: f32[2], index: 3, kind: input, shape index: {}]
  %s4 = inlined_call_operand.hbm [shape: f32[2,128], index: 4, kind: output, shape index: {}]
  %s5 = sld [smem:[#allocation0]]
  $region90: #{_lambda_.1} parent=0
    _
  %s7 = ssub.s32 1, %s5
  %s8 = scalar_select 0, %s7, %s5
  $region1: #{_lambda_.1} parent=0
    #allocation4 [shape = 'u8[512]{0}', space=smem, size = 0x200, scoped, tag = 'input window, operand 0, single buffered']
    #allocation5 [shape = 's32[1]{0}', space=sflag, size = 0x4, scoped, tag = 'scoped memory for _lambda_.1']
    #allocation6 [shape = 's32[1]{0}', space=sflag, size = 0x4, scoped, tag = 'scoped memory for _lambda_.1']
    #allocation7 [shape = 'u8[512]{0}', space=smem, size = 0x200, scoped, tag = 'input window, operand 3, single buffered']
    #allocation8 [shape = 's32[1]{0}', space=sflag, size = 0x4, scoped, tag = 'scoped memory for _lambda_.1']
    #allocation9 [shape = 'u8[1024]{0}', space=vmem, size = 0x400, scoped, tag = 'output window, operand 0, single buffered']
    %9 = vsyncpa [#allocation6], 0
    %10 = vsyncpa [#allocation8], 0
    %11 = vsyncpa [#allocation5], 0
    // Predicated region
    $region2: #{_lambda_.1} parent=1 // pred_check
      _
    $region3: #{_lambda_.1} parent=1 // pred_check_branch
      %13 = sbr.rel (0) target = $region5
    $region4: #{_lambda_.1} parent=1 // pred_region
      %s15 = ssub.s32 16, 16
      %16 = vsyncadd [#allocation6], %s15
      %s18 = sshll.u32 %s0, 4
      %s19 = int_to_ptr.vmem [resolvable:$true] %s18
      %21 = dma.vmem_to_smem %s19, 16, [#allocation4], [#allocation6]
    $region5: #{_lambda_.1} parent=1 // pred_fallthru
      _
    // Predicated region
    $region6: #{_lambda_.1} parent=1 // pred_check
      _
    $region7: #{_lambda_.1} parent=1 // pred_check_branch
      %23 = sbr.rel (0) target = $region9
    $region8: #{_lambda_.1} parent=1 // pred_region
      _
    $region9: #{_lambda_.1} parent=1 // pred_fallthru
      _
    // Predicated region
    $region10: #{_lambda_.1} parent=1 // pred_check
      _
    $region11: #{_lambda_.1} parent=1 // pred_check_branch
      %25 = sbr.rel (0) target = $region13
    $region12: #{_lambda_.1} parent=1 // pred_region
      %s27 = ssub.s32 16, 16
      %28 = vsyncadd [#allocation8], %s27
      %s30 = sshll.u32 %s3, 4
      %s31 = int_to_ptr.vmem [resolvable:$true] %s30
      %33 = dma.vmem_to_smem %s31, 16, [#allocation7], [#allocation8]
    $region13: #{_lambda_.1} parent=1 // pred_fallthru
      _
    // Predicated region
    $region14: #{_lambda_.1} parent=1 // pred_check
      _
    $region15: #{_lambda_.1} parent=1 // pred_check_branch
      %35 = sbr.rel (0) target = $region17
    $region16: #{_lambda_.1} parent=1 // pred_region
      %36 = dma.done [#allocation6], 16
    $region17: #{_lambda_.1} parent=1 // pred_fallthru
      _
    // Predicated region
    $region18: #{_lambda_.1} parent=1 // pred_check
      _
    $region19: #{_lambda_.1} parent=1 // pred_check_branch
      %38 = sbr.rel (0) target = $region21
    $region20: #{_lambda_.1} parent=1 // pred_region
      %39 = dma.done [#allocation8], 16
    $region21: #{_lambda_.1} parent=1 // pred_fallthru
      _
    %40 = sfence
    %s41 = sld [smem:[#allocation4]]
    %s42 = scalar_lea.vmem %s1, %s41
    %p44 = scmp.lt.u32.totalorder 1, 8
    %p45 = pneg %p44
    // Predicated region
    $region22: #{_lambda_.1} parent=1 // pred_check
      _
    $region23: #{_lambda_.1} parent=1 // pred_check_branch
      %47 = sbr.rel (%p44) target = $region25
    $region24: #{_lambda_.1} parent=1 // pred_region
      %s62 = sand.u32 1, 7
      %p63 = scmp.eq.s32.totalorder %s62, 0
      %p64 = pneg %p63
      // Predicated region
      $region37: #{_lambda_.1} parent=24 // pred_check
        _
      $region38: #{_lambda_.1} parent=24 // pred_check_branch
        %66 = sbr.rel (%p63) target = $region40
      $region39: #{_lambda_.1} parent=24 // pred_region
        %s67 = sand.u32 1, 7
        %s68 = ssub.s32 1, %s67
        %s69 = scalar_lea.vmem %s42, %s68
        %s70 = ssub.s32 1, %s67
        %s71 = scalar_lea.vmem [#allocation2], %s70
        %s72 = sshllo.u32 0, %s67
        loop: start=0, step=1, limit=1
        $region41: #{_lambda_.1} parent=39 // loop_pre_header
          _
        $region42: #{_lambda_.1} parent=39 // loop_header
          %s74 = sphi 0, %s78
          %p75 = scmp.ge.s32.totalorder %s74, 1
          %s79 = sphi %s69, %s69
          %s80 = sphi %s71, %s71
        $region43: #{_lambda_.1} parent=39 // loop_header_branch
          %77 = sbr.rel (%p75) target = $region47
        $region44: #{_lambda_.1} parent=39 // loop_body
          %v81 = vld [vmem:[%s79] sm:%s72]
          %82 = vst [vmem:[%s80] sm:%s72] %v81
        $region45: #{_lambda_.1} parent=39 // loop_footer
          %s78 = sadd.s32 1, %s74
        $region46: #{_lambda_.1} parent=39 // loop_footer_branch
          %73 = sbr.rel target = $region42
        $region47: #{_lambda_.1} parent=39 // loop_exit
          _
      $region40: #{_lambda_.1} parent=24 // pred_fallthru
        _
    $region25: #{_lambda_.1} parent=1 // pred_fallthru
      _
    // Predicated region
    $region26: #{_lambda_.1} parent=1 // pred_check
      %p48 = pneg %p44
    $region27: #{_lambda_.1} parent=1 // pred_check_branch
      %50 = sbr.rel (%p48) target = $region29
    $region28: #{_lambda_.1} parent=1 // pred_region
      %s51 = sshllo.u32 0, 1
      loop: start=0, step=1, limit=1
      $region30: #{_lambda_.1} parent=28 // loop_pre_header
        _
      $region31: #{_lambda_.1} parent=28 // loop_header
        %s53 = sphi 0, %s57
        %p54 = scmp.ge.s32.totalorder %s53, 1
        %s58 = sphi %s42, %s42
        %s59 = sphi [#allocation2], [#allocation2]
      $region32: #{_lambda_.1} parent=28 // loop_header_branch
        %56 = sbr.rel (%p54) target = $region36
      $region33: #{_lambda_.1} parent=28 // loop_body
        %v60 = vld [vmem:[%s58] sm:%s51]
        %61 = vst [vmem:[%s59] sm:%s51] %v60
      $region34: #{_lambda_.1} parent=28 // loop_footer
        %s57 = sadd.s32 1, %s53
      $region35: #{_lambda_.1} parent=28 // loop_footer_branch
        %52 = sbr.rel target = $region31
      $region36: #{_lambda_.1} parent=28 // loop_exit
        _
    $region29: #{_lambda_.1} parent=1 // pred_fallthru
      _
    // Predicated region
    $region48: #{_lambda_.1} parent=1 // pred_check
      _
    $region49: #{_lambda_.1} parent=1 // pred_check_branch
      %85 = sbr.rel (0) target = $region51
    $region50: #{_lambda_.1} parent=1 // pred_region
      %86 = vsyncadd [#allocation3], 16
    $region51: #{_lambda_.1} parent=1 // pred_fallthru
      _
    %s87 = sld [smem:[#allocation4 + $0x1]]
    %s88 = scalar_lea.vmem %s1, %s87
    %s89 = scalar_lea.vmem [#allocation2], 1
    %s90 = scalar_lea.sflag [#allocation3], 1
    %p92 = scmp.lt.u32.totalorder 1, 8
    %p93 = pneg %p92
    // Predicated region
    $region52: #{_lambda_.1} parent=1 // pred_check
      _
    $region53: #{_lambda_.1} parent=1 // pred_check_branch
      %95 = sbr.rel (%p92) target = $region55
    $region54: #{_lambda_.1} parent=1 // pred_region
      %s110 = sand.u32 1, 7
      %p111 = scmp.eq.s32.totalorder %s110, 0
      %p112 = pneg %p111
      // Predicated region
      $region67: #{_lambda_.1} parent=54 // pred_check
        _
      $region68: #{_lambda_.1} parent=54 // pred_check_branch
        %114 = sbr.rel (%p111) target = $region70
      $region69: #{_lambda_.1} parent=54 // pred_region
        %s115 = sand.u32 1, 7
        %s116 = ssub.s32 1, %s115
        %s117 = scalar_lea.vmem %s88, %s116
        %s118 = ssub.s32 1, %s115
        %s119 = scalar_lea.vmem %s89, %s118 [#allocation2]
        %s120 = sshllo.u32 0, %s115
        loop: start=0, step=1, limit=1
        $region71: #{_lambda_.1} parent=69 // loop_pre_header
          _
        $region72: #{_lambda_.1} parent=69 // loop_header
          %s122 = sphi 0, %s126
          %p123 = scmp.ge.s32.totalorder %s122, 1
          %s127 = sphi %s117, %s117
          %s128 = sphi %s119, %s119
        $region73: #{_lambda_.1} parent=69 // loop_header_branch
          %125 = sbr.rel (%p123) target = $region77
        $region74: #{_lambda_.1} parent=69 // loop_body
          %v129 = vld [vmem:[%s127] sm:%s120]
          %130 = vst [vmem:[%s128] sm:%s120] %v129
        $region75: #{_lambda_.1} parent=69 // loop_footer
          %s126 = sadd.s32 1, %s122
        $region76: #{_lambda_.1} parent=69 // loop_footer_branch
          %121 = sbr.rel target = $region72
        $region77: #{_lambda_.1} parent=69 // loop_exit
          _
      $region70: #{_lambda_.1} parent=54 // pred_fallthru
        _
    $region55: #{_lambda_.1} parent=1 // pred_fallthru
      _
    // Predicated region
    $region56: #{_lambda_.1} parent=1 // pred_check
      %p96 = pneg %p92
    $region57: #{_lambda_.1} parent=1 // pred_check_branch
      %98 = sbr.rel (%p96) target = $region59
    $region58: #{_lambda_.1} parent=1 // pred_region
      %s99 = sshllo.u32 0, 1
      loop: start=0, step=1, limit=1
      $region60: #{_lambda_.1} parent=58 // loop_pre_header
        _
      $region61: #{_lambda_.1} parent=58 // loop_header
        %s101 = sphi 0, %s105
        %p102 = scmp.ge.s32.totalorder %s101, 1
        %s106 = sphi %s88, %s88
        %s107 = sphi %s89, %s89
      $region62: #{_lambda_.1} parent=58 // loop_header_branch
        %104 = sbr.rel (%p102) target = $region66
      $region63: #{_lambda_.1} parent=58 // loop_body
        %v108 = vld [vmem:[%s106] sm:%s99]
        %109 = vst [vmem:[%s107] sm:%s99] %v108
      $region64: #{_lambda_.1} parent=58 // loop_footer
        %s105 = sadd.s32 1, %s101
      $region65: #{_lambda_.1} parent=58 // loop_footer_branch
        %100 = sbr.rel target = $region61
      $region66: #{_lambda_.1} parent=58 // loop_exit
        _
    $region59: #{_lambda_.1} parent=1 // pred_fallthru
      _
    // Predicated region
    $region78: #{_lambda_.1} parent=1 // pred_check
      _
    $region79: #{_lambda_.1} parent=1 // pred_check_branch
      %133 = sbr.rel (0) target = $region81
    $region80: #{_lambda_.1} parent=1 // pred_region
      %134 = vsyncadd %s90, 16
    $region81: #{_lambda_.1} parent=1 // pred_fallthru
      _
    %s135 = smul.u32 1, 1
    %s136 = sshll.u32 %s135, 4
    %137 = dma.done [#allocation3], %s136
    %s138 = sshll.u32 %s135, 4
    %139 = dma.done %s90, %s138
    %v140 = vld [vmem:[#allocation2] sm:$0x3]
    %v141 = vld [vmem:[%s2] sm:$0x3]
    %v142 = vlaneseq
    %v143 = vshrl.u32 %v142, 7
    %v144 = vsub.s32 0, %v143
    %v145 = vrot.slane %v141, %v144
    %v146 = vmul.f32 %v140, %v145
    %vm147 = vcmask 254976
    %v148 = vsel %vm147, %v146, 0.0
    %149 = vadd.xlane.f32.xlu0 %v148
    %v150 = vpop.xlane.xlu0 %149
    %s151 = sld [smem:[#allocation7]]
    %v152 = vstv %s151
    %v153 = vadd.f32 %v150, %v152
    %v154 = vlaneseq
    %v155 = vshrl.u32 %v154, 7
    %v156 = vsub.s32 1, %v155
    %v157 = vrot.slane %v141, %v156
    %v158 = vmul.f32 %v140, %v157
    %v159 = vsel %vm147, %v158, 0.0
    %160 = vadd.xlane.f32.xlu0 %v159
    %v161 = vpop.xlane.xlu0 %160
    %s162 = sld [smem:[#allocation7 + $0x1]]
    %v163 = vstv %s162
    %v164 = vadd.f32 %v161, %v163
    %v165 = vsub.f32 %v153, %v164
    %v166 = vmul.f32 %v165, 1.442695
    %v167 = vpow.pop %v166
    %v168 = vadd.f32 %v167, 1.0
    %v169 = vrcp.pop %v168
    %v170 = vmul.f32 1.0, %v169
    %v171 = vsub.f32 1.0, %v170
    %v172 = vlaneseq
    %v173 = vand.u32 %v172, 127
    %vm174 = vcmp.eq.s32.totalorder %v173, 0
    %vm175 = vcmp.eq.s32.totalorder %v173, 1
    %v176 = vsel %vm175, %v170, 0.0
    %v177 = vsel %vm174, %v171, %v176
    %178 = vst [vmem:[#allocation9] sm:$0x3] %v177
    // Predicated region
    $region82: #{_lambda_.1} parent=1 // pred_check
      _
    $region83: #{_lambda_.1} parent=1 // pred_check_branch
      %180 = sbr.rel (0) target = $region85
    $region84: #{_lambda_.1} parent=1 // pred_region
      %s182 = ssub.s32 32, 32
      %183 = vsyncadd [#allocation5], %s182
      %s185 = sshll.u32 [#allocation9], 4
      %s186 = int_to_ptr.vmem [resolvable:$true] %s185
      %188 = dma.vmem_to_hbm [thread:$0]  %s186, 32, %s4, [#allocation5]
    $region85: #{_lambda_.1} parent=1 // pred_fallthru
      _
    // Predicated region
    $region86: #{_lambda_.1} parent=1 // pred_check
      _
    $region87: #{_lambda_.1} parent=1 // pred_check_branch
      %190 = sbr.rel (0) target = $region89
    $region88: #{_lambda_.1} parent=1 // pred_region
      %191 = dma.done [#allocation5], 32
    $region89: #{_lambda_.1} parent=1 // pred_fallthru
      _
    %192 = vsyncpa [#allocation5], 1
    %193 = vsyncpa [#allocation6], 1
    %194 = vsyncpa [#allocation8], 1
  %195 = vsyncmov [#allocation3]
  %s196 = vpop.sfrf %195
  %p197 = scmp.eq.s32.totalorder %s196, 0
  %p198 = pneg %p197
  %200 = shalt.err (%p198)
  %s201 = scalar_lea.sflag [#allocation3], 1
  %202 = vsyncmov %s201
  %s203 = vpop.sfrf %202
  %p204 = scmp.eq.s32.totalorder %s203, 0
  %p205 = pneg %p204
  %207 = shalt.err (%p205)

</llo_original>
